<compile_context>
chip_gen: v5e
topology: v5e:2x2
jax: 0.10.0
libtpu: 0.0.40
codegen_flags: <defaults>
</compile_context>

<pallas_src>
import jax
import jax.numpy as jnp
from jax.experimental import pallas as pl
from jax.experimental.pallas import tpu as pltpu

_LANES = 128           # vreg lane width: last dim of the 2-D slab
_MAX_BLOCK_ROWS = 512  # 512x128 f32 tile = 256 KiB; ~85% of HBM roofline on v6e,
                       # and small enough for v7x's 32 MiB scoped / 64 MiB VMEM.


def _identity_copy_kernel(x_ref, o_ref):
    # Elementwise pass-through on the current VMEM tile (full-lane stores).
    o_ref[...] = x_ref[...]


def _identity_impl(x: jax.Array) -> jax.Array:
    total = x.size
    # Fast path: anything the kernel cannot lay out lane-dense (ragged last
    # vreg, scalars, empty tensors) is returned as-is -- exactly Identity.
    if total == 0 or total % _LANES != 0:
        return x

    rows = total // _LANES
    x2d = x.reshape(rows, _LANES)

    # Either block_rows == rows (full-array-dims escape) or a multiple of 8,
    # so the (8, 128) block constraint is always satisfied; Pallas masks the
    # ragged final tile when rows is not a multiple of block_rows.
    block_rows = min(rows, _MAX_BLOCK_ROWS)
    grid = (pl.cdiv(rows, block_rows),)

    out2d = pl.pallas_call(
        _identity_copy_kernel,
        out_shape=jax.ShapeDtypeStruct((rows, _LANES), x.dtype),
        grid=grid,
        in_specs=[pl.BlockSpec((block_rows, _LANES), lambda i: (i, 0))],
        out_specs=pl.BlockSpec((block_rows, _LANES), lambda i: (i, 0)),
        # Output aliases the input buffer: a pure copy needs no extra HBM
        # allocation.  (If the caller donates x, the copy is fully in-place.)
        input_output_aliases={0: 0},
        compiler_params=pltpu.CompilerParams(
            dimension_semantics=("parallel",)),
    )(x2d)

    return out2d.reshape(x.shape)


# Shapes are static under jit, so the fast-path branch is resolved at trace time.
identity = jax.jit(_identity_impl)


if __name__ == "__main__":
    key = jax.random.PRNGKey(0)
    # NCHW input consistent with NB201 ops: batch=2, channels=4, 16x16 spatial.
    x = jax.random.normal(key, (2, 4, 16, 16), dtype=jnp.float32)

    y = identity(x)
    jax.block_until_ready(y)

    assert y.shape == x.shape
    assert y.dtype == x.dtype
    assert bool(jnp.all(y == x))

    print("KERNEL_OK")
</pallas_src>

<mosaic_0001>
module attributes {stable_mosaic.version = 11 : i64} {
  func.func @_identity_copy_kernel(%arg0: i32, %arg1: memref<16x128xf32, #tpu.memory_space<vmem>>, %arg2: memref<16x128xf32, #tpu.memory_space<vmem>>) attributes {dimension_semantics = [#tpu.dimension_semantics<parallel>], iteration_bounds = array<i64: 1>, scalar_prefetch = 0 : i64, scratch_operands = 0 : i64, tpu.core_type = #tpu.core_type<tc>, window_params = [{transform_indices = @transform_0, window_bounds = array<i64: 16, 128>}, {transform_indices = @transform_1, window_bounds = array<i64: 16, 128>}]} {
    %c0 = arith.constant 0 : index
    %c0_0 = arith.constant 0 : index
    %0 = vector.load %arg1[%c0, %c0_0] : memref<16x128xf32, #tpu.memory_space<vmem>>, vector<16x128xf32>
    %c0_1 = arith.constant 0 : index
    %c0_2 = arith.constant 0 : index
    %1 = vector.load %arg2[%c0_1, %c0_2] : memref<16x128xf32, #tpu.memory_space<vmem>>, vector<16x128xf32>
    tpu.vector_store %arg2[%c0_1, %c0_2], %0 {strides = array<i32>} : memref<16x128xf32, #tpu.memory_space<vmem>>, vector<16x128xf32>,
    return
  }
  func.func @transform_0(%arg0: i32) -> (i32, i32) {
    %c0_i32 = arith.constant 0 : i32
    %c0_i32_0 = arith.constant 0 : i32
    return %arg0, %c0_i32 : i32, i32
  }
  func.func @transform_1(%arg0: i32) -> (i32, i32) {
    %c0_i32 = arith.constant 0 : i32
    %c0_i32_0 = arith.constant 0 : i32
    return %arg0, %c0_i32 : i32, i32
  }
}

</mosaic_0001>

<llo_original>
// kernel: _identity_impl.1
$region0: #{_identity_impl.1}
  #allocation0 [shape = 'u32[]', space=smem, size = 0x4, offset = 0x4, fixed_abs, tag = 'smem constant byte address 0x4 - core index']
  #allocation1 [shape = 'u32[72,128]{1,0:T(1,128)}', space=vmem, size = 0x9000, scoped, tag = 'internal scratch']
  %s0 = inlined_call_operand.vmem [shape: f32[16,128], index: 0, kind: input, shape index: {}, may-alias: {0,1}]
  %s1 = inlined_call_operand.vmem [shape: f32[16,128], index: 1, kind: output, shape index: {}, may-alias: {0,1}]
  %s2 = sld [smem:[#allocation0]]
  $region14: #{_identity_impl.1} parent=0
    _
  %s4 = ssub.s32 1, %s2
  %s5 = scalar_select 0, %s4, %s2
  // Predicated region
  $region2: #{_identity_impl.1} parent=0 // pred_check
    _
  $region3: #{_identity_impl.1} parent=0 // pred_check_branch
    %7 = sbr.rel (0) target = $region5
  $region4: #{_identity_impl.1} parent=0 // pred_region
    _
  $region5: #{_identity_impl.1} parent=0 // pred_fallthru
    _
  %v8 = vld [vmem:[%s0] sm:$0xff]
  %v9 = vld [vmem:[%s0 + $0x8] sm:$0xff]
  %10 = vst [vmem:[%s1] sm:$0xff] %v8
  %11 = vst [vmem:[%s1 + $0x8] sm:$0xff] %v9
  // Predicated region
  $region6: #{_identity_impl.1} parent=0 // pred_check
    _
  $region7: #{_identity_impl.1} parent=0 // pred_check_branch
    %13 = sbr.rel (0) target = $region9
  $region8: #{_identity_impl.1} parent=0 // pred_region
    _
  $region9: #{_identity_impl.1} parent=0 // pred_fallthru
    _
  // Predicated region
  $region10: #{_identity_impl.1} parent=0 // pred_check
    _
  $region11: #{_identity_impl.1} parent=0 // pred_check_branch
    %15 = sbr.rel (0) target = $region13
  $region12: #{_identity_impl.1} parent=0 // pred_region
    _
  $region13: #{_identity_impl.1} parent=0 // pred_fallthru
    _

</llo_original>
